<compile_context>
chip_gen: v7x
topology: tpu7x:2x2x1
jax: 0.10.0
libtpu: 0.0.40
codegen_flags: <defaults>
</compile_context>

<pallas_src>
import functools
import math

import jax
import jax.numpy as jnp
from jax.experimental import pallas as pl
from jax.experimental.pallas import tpu as pltpu


# ----------------------------------------------------------------------------
# Parameter / buffer construction (plain JAX glue, matches the PyTorch __init__)
# ----------------------------------------------------------------------------
def make_positional_encoding_buffer(d_model: int, max_len: int = 5000) -> jnp.ndarray:
    position = jnp.arange(max_len, dtype=jnp.float32)[:, None]            # [max_len, 1]
    div_term = jnp.exp(
        jnp.arange(0, d_model, 2, dtype=jnp.float32) * (-math.log(10000.0) / d_model)
    )                                                                     # [d_model//2]
    pe = jnp.zeros((max_len, 1, d_model), dtype=jnp.float32)
    pe = pe.at[:, 0, 0::2].set(jnp.sin(position * div_term))
    pe = pe.at[:, 0, 1::2].set(jnp.cos(position * div_term))
    return pe


# ----------------------------------------------------------------------------
# Pallas kernel: one [TS, B*D] tile of  y = dropout(x + pe)
# ----------------------------------------------------------------------------
def _pe_dropout_kernel(seed_ref, x_ref, pe_ref, o_ref, *, p: float, batch: int,
                       d_model: int, tile_rows: int):
    pe_t = pe_ref[...]                               # [TS, D], same dtype as x
    rows = x_ref.shape[0]                            # static block rows
    cols = batch * d_model

    if p > 0.0:
        # Scalar part of the per-element counter: computed once, on the scalar
        # unit.  Global row offset folded with the seed mix, all in uint32.
        base = (pl.program_id(0).astype(jnp.uint32) * jnp.uint32(tile_rows * cols)
                + seed_ref[0].astype(jnp.uint32) * jnp.uint32(0x9E3779B9))
        threshold = jnp.uint32(min(int(round(p * 4294967296.0)), 0xFFFFFFFF))
        inv_keep = 1.0 / (1.0 - p)                   # weak-typed: keeps x dtype

        def dropout(y, ctr):
            # Trimmed fmix32 (2 multiply rounds): plenty of decorrelation for a
            # Bernoulli keep mask; pure-integer threshold compare (no float path).
            u = ctr ^ (ctr >> 16)
            u = u * jnp.uint32(0x7FEB352D)
            u = u ^ (u >> 15)
            u = u * jnp.uint32(0x846CA68B)
            u = u ^ (u >> 16)
            return jnp.where(u >= threshold, y * inv_keep, 0.0)

    if batch > 1 and d_model % 128 == 0:
        # Lane-aligned per-batch column slices: no [TS, B*D] broadcast-pe temp,
        # no relayout, no extra store traffic.  Offsets are static & 128-aligned.
        if p > 0.0:
            r = jax.lax.broadcasted_iota(jnp.int32, (rows, d_model), 0).astype(jnp.uint32)
            c = jax.lax.broadcasted_iota(jnp.int32, (rows, d_model), 1).astype(jnp.uint32)
            ctr0 = r * jnp.uint32(cols) + c + base   # shared across batch slices
        for b in range(batch):
            lo = b * d_model
            yb = x_ref[:, lo:lo + d_model] + pe_t
            if p > 0.0:
                yb = dropout(yb, ctr0 if b == 0 else ctr0 + jnp.uint32(lo))
            o_ref[:, lo:lo + d_model] = yb.astype(o_ref.dtype)
    else:
        # Fallback (batch == 1, or d_model not lane-aligned): one full-tile pass.
        pe_b = jnp.tile(pe_t, (1, batch)) if batch > 1 else pe_t
        y = x_ref[...] + pe_b
        if p > 0.0:
            r = jax.lax.broadcasted_iota(jnp.int32, (rows, cols), 0).astype(jnp.uint32)
            c = jax.lax.broadcasted_iota(jnp.int32, (rows, cols), 1).astype(jnp.uint32)
            y = dropout(y, r * jnp.uint32(cols) + c + base)
        o_ref[...] = y.astype(o_ref.dtype)


# ----------------------------------------------------------------------------
# Tile-rows picker: sublane-packing aligned, VMEM-budgeted, megacore-friendly
# ----------------------------------------------------------------------------
def _pick_tile_rows(n_rows: int, row_bytes: int, target_bytes: int, align: int) -> int:
    if n_rows <= align:
        return n_rows                                # block == full extent: legal
    max_rows = max(align, target_bytes // max(row_bytes, 1))
    ts = min((max_rows // align) * align, (n_rows // align) * align)
    ts = max(align, ts)
    # v7x has 2 TCs: if everything fits in one tile, split so both get work.
    if math.ceil(n_rows / ts) < 2 and ts >= 2 * align:
        ts = (ts // 2 // align) * align
    # Prefer an even tile count so neither core idles on the last step.
    n_tiles = math.ceil(n_rows / ts)
    if n_tiles > 1 and n_tiles % 2 == 1:
        ts2 = math.ceil(math.ceil(n_rows / (n_tiles + 1)) / align) * align
        if align <= ts2 <= ts and math.ceil(n_rows / ts2) % 2 == 0:
            ts = ts2
    return ts


# ----------------------------------------------------------------------------
# Wrapper: equivalent of PositionalEncoding.forward(x)
# ----------------------------------------------------------------------------
def positional_encoding_forward(
    x: jnp.ndarray,                 # [S, B, D], f32 or bf16
    pe: jnp.ndarray,                # [max_len, 1, D], f32
    *,
    dropout_p: float = 0.1,
    training: bool = True,
    seed: int = 0,
    target_tile_bytes: int = 4 * 1024 * 1024,
) -> jnp.ndarray:
    S, B, D = x.shape
    C = B * D
    p = float(dropout_p) if training else 0.0
    if p >= 1.0:                                     # torch: p == 1 zeroes everything
        return jnp.zeros_like(x)
    p = max(p, 0.0)

    x2 = x.reshape(S, C)                             # free row-major view, lane-dense
    pe2 = pe[:S, 0, :].astype(x.dtype)               # [S, D], tiny

    itemsize = jnp.dtype(x.dtype).itemsize
    align = {1: 32, 2: 16}.get(itemsize, 8)          # native sublane packing
    ts = _pick_tile_rows(S, C * itemsize, target_tile_bytes, align)
    grid = (pl.cdiv(S, ts),)

    kernel = functools.partial(_pe_dropout_kernel, p=p, batch=B, d_model=D,
                               tile_rows=ts)

    out2 = pl.pallas_call(
        kernel,
        out_shape=jax.ShapeDtypeStruct((S, C), x.dtype),
        grid_spec=pltpu.PrefetchScalarGridSpec(
            num_scalar_prefetch=1,                   # seed scalar lands in SMEM
            grid=grid,
            in_specs=[
                pl.BlockSpec((ts, C), lambda i, seed_ref: (i, 0)),
                pl.BlockSpec((ts, D), lambda i, seed_ref: (i, 0)),
            ],
            out_specs=pl.BlockSpec((ts, C), lambda i, seed_ref: (i, 0)),
        ),
        compiler_params=pltpu.CompilerParams(
            dimension_semantics=("parallel",),       # shard tiles across v7x's 2 TCs
            vmem_limit_bytes=48 * 1024 * 1024,       # headroom under v7x 64 MiB/TC
        ),
        cost_estimate=pl.CostEstimate(
            flops=2 * S * C,
            transcendentals=0,
            bytes_accessed=2 * S * C * itemsize + S * D * itemsize,
        ),
    )(jnp.asarray([seed], dtype=jnp.int32), x2, pe2)

    return out2.reshape(S, B, D)


# ----------------------------------------------------------------------------
# Demo / smoke test
# ----------------------------------------------------------------------------
if __name__ == "__main__":
    d_model = 128
    max_len = 64
    seq_len = 16
    batch = 2
    dropout_p = 0.1

    key = jax.random.PRNGKey(0)
    x = jax.random.normal(key, (seq_len, batch, d_model), dtype=jnp.float32)
    pe = make_positional_encoding_buffer(d_model, max_len)
    ref = x + pe[:seq_len]

    # Eval mode (no dropout): must match the pure-JAX reference.
    y_eval = jax.block_until_ready(
        positional_encoding_forward(x, pe, dropout_p=dropout_p, training=False))
    assert y_eval.shape == (seq_len, batch, d_model)
    assert jnp.allclose(y_eval, ref, atol=1e-6), "eval-mode mismatch"

    # Training mode with a tiny tile budget -> multi-step grid (exercises tiling).
    y_tiled = jax.block_until_ready(
        positional_encoding_forward(x, pe, dropout_p=dropout_p, training=True,
                                    seed=1234, target_tile_bytes=8 * 1024))
    kept = y_tiled != 0.0
    scaled = ref / (1.0 - dropout_p)
    assert jnp.allclose(jnp.where(kept, y_tiled, 0.0),
                        jnp.where(kept, scaled, 0.0), atol=1e-5)
    n_drop = int(jnp.sum(~kept))
    assert 0 < n_drop < 0.5 * kept.size, f"implausible drop count {n_drop}"

    # Same seed, default tiling: counter-based PRNG => identical mask.
    y_one = jax.block_until_ready(
        positional_encoding_forward(x, pe, dropout_p=dropout_p, training=True,
                                    seed=1234))
    assert jnp.array_equal(y_tiled, y_one), "dropout mask depends on tiling"

    # p = 1.0 guard: torch semantics -> all zeros.
    y_all_drop = jax.block_until_ready(
        positional_encoding_forward(x, pe, dropout_p=1.0, training=True))
    assert not jnp.any(y_all_drop), "p=1.0 should zero the output"

    # bf16 I/O path (halves HBM traffic; add stays in bf16 on v6e/v7x).
    x_bf = x.astype(jnp.bfloat16)
    y_bf = jax.block_until_ready(
        positional_encoding_forward(x_bf, pe, dropout_p=dropout_p, training=False))
    ref_bf = (x_bf.astype(jnp.float32) + pe[:seq_len]).astype(jnp.bfloat16)
    assert jnp.allclose(y_bf.astype(jnp.float32), ref_bf.astype(jnp.float32),
                        atol=5e-2)

    print("KERNEL_OK")
</pallas_src>

<mosaic_0001>
module attributes {stable_mosaic.version = 11 : i64} {
  func.func @_pe_dropout_kernel(%arg0: i32, %arg1: memref<1xi32, #tpu.memory_space<smem>>, %arg2: memref<8x256xf32, #tpu.memory_space<vmem>>, %arg3: memref<8x128xf32, #tpu.memory_space<vmem>>, %arg4: memref<8x256xf32, #tpu.memory_space<vmem>>) attributes {dimension_semantics = [#tpu.dimension_semantics<parallel>], iteration_bounds = array<i64: 2>, scalar_prefetch = 1 : i64, scratch_operands = 0 : i64, tpu.core_type = #tpu.core_type<tc>, window_params = [{transform_indices = @transform_0, window_bounds = array<i64: 8, 256>}, {transform_indices = @transform_1, window_bounds = array<i64: 8, 128>}, {transform_indices = @transform_2, window_bounds = array<i64: 8, 256>}]} {
    %c0 = arith.constant 0 : index
    %c0_0 = arith.constant 0 : index
    %0 = vector.load %arg3[%c0, %c0_0] : memref<8x128xf32, #tpu.memory_space<vmem>>, vector<8x128xf32>
    %c0_1 = arith.constant 0 : index
    %c0_2 = arith.constant 0 : index
    %1 = vector.load %arg2[%c0_1, %c0_2] : memref<8x256xf32, #tpu.memory_space<vmem>>, vector<8x128xf32>
    %2 = arith.addf %1, %0 : vector<8x128xf32>
    %c0_3 = arith.constant 0 : index
    %c0_4 = arith.constant 0 : index
    %3 = vector.load %arg4[%c0_3, %c0_4] : memref<8x256xf32, #tpu.memory_space<vmem>>, vector<8x128xf32>
    tpu.vector_store %arg4[%c0_3, %c0_4], %2 {strides = array<i32>} : memref<8x256xf32, #tpu.memory_space<vmem>>, vector<8x128xf32>,
    %c0_5 = arith.constant 0 : index
    %c128 = arith.constant 128 : index
    %4 = vector.load %arg2[%c0_5, %c128] : memref<8x256xf32, #tpu.memory_space<vmem>>, vector<8x128xf32>
    %5 = arith.addf %4, %0 : vector<8x128xf32>
    %c0_6 = arith.constant 0 : index
    %c128_7 = arith.constant 128 : index
    %6 = vector.load %arg4[%c0_6, %c128_7] : memref<8x256xf32, #tpu.memory_space<vmem>>, vector<8x128xf32>
    tpu.vector_store %arg4[%c0_6, %c128_7], %5 {strides = array<i32>} : memref<8x256xf32, #tpu.memory_space<vmem>>, vector<8x128xf32>,
    return
  }
  func.func @transform_0(%arg0: i32, %arg1: memref<1xi32, #tpu.memory_space<smem>>) -> (i32, i32) {
    %c0_i32 = arith.constant 0 : i32
    %c0_i32_0 = arith.constant 0 : i32
    return %arg0, %c0_i32 : i32, i32
  }
  func.func @transform_1(%arg0: i32, %arg1: memref<1xi32, #tpu.memory_space<smem>>) -> (i32, i32) {
    %c0_i32 = arith.constant 0 : i32
    %c0_i32_0 = arith.constant 0 : i32
    return %arg0, %c0_i32 : i32, i32
  }
  func.func @transform_2(%arg0: i32, %arg1: memref<1xi32, #tpu.memory_space<smem>>) -> (i32, i32) {
    %c0_i32 = arith.constant 0 : i32
    %c0_i32_0 = arith.constant 0 : i32
    return %arg0, %c0_i32 : i32, i32
  }
}

</mosaic_0001>

<llo_original>
// kernel: tpu_custom_call.1
$region0: #{tpu_custom_call.1}
  #allocation0 [shape = 'u32[]', space=smem, size = 0x4, offset = 0x4, fixed_abs, tag = 'smem constant byte address 0x4 - core index']
  #allocation1 [shape = 'u32[144,128]{1,0:T(1,128)}', space=vmem, size = 0x12000, scoped, tag = 'internal scratch']
  #allocation2 [shape = 's32[1]{0}', space=sflag, size = 0x4, scoped, tag = 'scoped memory for tpu_custom_call.1']
  #allocation3 [shape = 's32[1]{0:T(128)S(6)}', space=smem, size = 0x200, scoped, tag = 'prefetched SMEM operand 0']
  %s0 = inlined_call_operand.<no memory space> [shape: s32[1], index: 0, kind: input, shape index: {}]
  %s1 = inlined_call_operand.hbm [shape: f32[16,256], index: 1, kind: input, shape index: {}]
  %s2 = inlined_call_operand.hbm [shape: f32[16,128], index: 2, kind: input, shape index: {}]
  %s3 = inlined_call_operand.hbm [shape: f32[16,256], index: 3, kind: output, shape index: {}]
  %s4 = sld [smem:[#allocation0]]
  $region49: #{tpu_custom_call.1} parent=0
    _
  %s6 = ssub.s32 1, %s4
  %s7 = scalar_select 0, %s6, %s4
  %8 = sst [smem:[#allocation3]] %s0
  $region1: #{tpu_custom_call.1} parent=0
    #allocation4 [shape = 'u8[16384]{0}', space=vmem, size = 0x4000, scoped, tag = 'input window, operand 1']
    #allocation5 [shape = 's32[2]{0}', space=sflag, size = 0x8, scoped, tag = 'scoped memory for tpu_custom_call.1']
    #allocation6 [shape = 's32[2]{0}', space=sflag, size = 0x8, scoped, tag = 'scoped memory for tpu_custom_call.1']
    #allocation7 [shape = 'u8[8192]{0}', space=vmem, size = 0x2000, scoped, tag = 'input window, operand 2']
    #allocation8 [shape = 's32[2]{0}', space=sflag, size = 0x8, scoped, tag = 'scoped memory for tpu_custom_call.1']
    #allocation9 [shape = 'u8[16384]{0}', space=vmem, size = 0x4000, scoped, tag = 'output window, operand 0']
    %9 = vsyncpa [#allocation5], 0
    %s10 = scalar_lea.sflag [#allocation5], 1
    %11 = vsyncpa %s10, 0
    %12 = vsyncpa [#allocation8], 0
    %s13 = scalar_lea.sflag [#allocation8], 1
    %14 = vsyncpa %s13, 0
    %15 = vsyncpa [#allocation6], 0
    %s16 = scalar_lea.sflag [#allocation6], 1
    %17 = vsyncpa %s16, 0
    loop: start=0, step=1, limit=4
    $region2: #{tpu_custom_call.1} parent=1 // loop_pre_header
      _
    $region3: #{tpu_custom_call.1} parent=1 // loop_header
      %s19 = sphi 0, %s23
      %p20 = scmp.ge.s32.totalorder %s19, 4
      %s29 = sphi 0, %s31
      %s32 = sphi 0, %s29
      %s33 = sphi 0, %s32
      %s49 = sphi 0, %s33
      %s55 = sphi 0, %s57
      %s58 = sphi 0, %s55
      %s59 = sphi 0, %s58
      %s75 = sphi 0, %s59
      %s81 = sphi 0, %s83
      %s84 = sphi 0, %s81
      %s85 = sphi 0, %s84
      %s101 = sphi 0, %s85
    $region4: #{tpu_custom_call.1} parent=1 // loop_header_branch
      %22 = sbr.rel (%p20) target = $region8
    $region5: #{tpu_custom_call.1} parent=1 // loop_body
      %s24 = ssub.s32 %s19, 1
      %s25 = ssub.s32 %s19, 2
      %s26 = sadd.s32 %s19, 1
      %s27 = ssub.s32 %s19, %s26
      %p28 = scmp.eq.s32.totalorder %s27, 0
      %s30 = sadd.s32 %s29, 1
      %s31 = scalar_select %p28, %s29, %s30
      %p34 = pneg %p28
      %p35 = scmp.eq.s32.totalorder %s19, 1
      %p36 = por %p34, %p35
      %p37 = scmp.ne.s32.totalorder %s29, %s32
      %p38 = scmp.eq.s32.totalorder %s19, 0
      %p39 = por %p37, %p38
      %p40 = scmp.ne.s32.totalorder %s29, %s32
      %p41 = scmp.eq.s32.totalorder %s24, 1
      %p42 = por %p40, %p41
      %p43 = scmp.ne.s32.totalorder %s32, %s33
      %p44 = scmp.eq.s32.totalorder %s24, 0
      %p45 = por %p43, %p44
      %p46 = scmp.ne.s32.totalorder %s32, %s33
      %p47 = scmp.eq.s32.totalorder %s25, 1
      %p48 = por %p46, %p47
      %p50 = scmp.ne.s32.totalorder %s33, %s49
      %p51 = scmp.eq.s32.totalorder %s25, 0
      %p52 = por %p50, %p51
      %s53 = ssub.s32 %s19, %s26
      %p54 = scmp.eq.s32.totalorder %s53, 0
      %s56 = sadd.s32 %s55, 1
      %s57 = scalar_select %p54, %s55, %s56
      %p60 = pneg %p54
      %p61 = scmp.eq.s32.totalorder %s19, 1
      %p62 = por %p60, %p61
      %p63 = scmp.ne.s32.totalorder %s55, %s58
      %p64 = scmp.eq.s32.totalorder %s19, 0
      %p65 = por %p63, %p64
      %p66 = scmp.ne.s32.totalorder %s55, %s58
      %p67 = scmp.eq.s32.totalorder %s24, 1
      %p68 = por %p66, %p67
      %p69 = scmp.ne.s32.totalorder %s58, %s59
      %p70 = scmp.eq.s32.totalorder %s24, 0
      %p71 = por %p69, %p70
      %p72 = scmp.ne.s32.totalorder %s58, %s59
      %p73 = scmp.eq.s32.totalorder %s25, 1
      %p74 = por %p72, %p73
      %p76 = scmp.ne.s32.totalorder %s59, %s75
      %p77 = scmp.eq.s32.totalorder %s25, 0
      %p78 = por %p76, %p77
      %s79 = ssub.s32 %s19, %s26
      %p80 = scmp.eq.s32.totalorder %s79, 0
      %s82 = sadd.s32 %s81, 1
      %s83 = scalar_select %p80, %s81, %s82
      %p86 = pneg %p80
      %p87 = scmp.eq.s32.totalorder %s19, 1
      %p88 = por %p86, %p87
      %p89 = scmp.ne.s32.totalorder %s81, %s84
      %p90 = scmp.eq.s32.totalorder %s19, 0
      %p91 = por %p89, %p90
      %p92 = scmp.ne.s32.totalorder %s81, %s84
      %p93 = scmp.eq.s32.totalorder %s24, 1
      %p94 = por %p92, %p93
      %p95 = scmp.ne.s32.totalorder %s84, %s85
      %p96 = scmp.eq.s32.totalorder %s24, 0
      %p97 = por %p95, %p96
      %p98 = scmp.ne.s32.totalorder %s84, %s85
      %p99 = scmp.eq.s32.totalorder %s25, 1
      %p100 = por %p98, %p99
      %p102 = scmp.ne.s32.totalorder %s85, %s101
      %p103 = scmp.eq.s32.totalorder %s25, 0
      %p104 = por %p102, %p103
      %p105 = scmp.le.s32.totalorder 1, %s19
      %p106 = scmp.lt.s32.totalorder %s19, 3
      %p107 = pnand %p105, %p106
      %p108 = pneg %p107
      // Predicated region
      $region9: #{tpu_custom_call.1} parent=5 // pred_check
        _
      $region10: #{tpu_custom_call.1} parent=5 // pred_check_branch
        %110 = sbr.rel (%p107) target = $region12
      $region11: #{tpu_custom_call.1} parent=5 // pred_region
        %s111 = ssub.s32 %s19, 1
      $region12: #{tpu_custom_call.1} parent=5 // pred_fallthru
        _
      %p112 = scmp.lt.s32.totalorder %s19, 2
      // Predicated region
      $region13: #{tpu_custom_call.1} parent=5 // pred_check
        %p113 = pneg %p112
      $region14: #{tpu_custom_call.1} parent=5 // pred_check_branch
        %115 = sbr.rel (%p113) target = $region16
      $region15: #{tpu_custom_call.1} parent=5 // pred_region
        // Predicated region
        $region17: #{tpu_custom_call.1} parent=15 // pred_check
          %p116 = pneg %p39
        $region18: #{tpu_custom_call.1} parent=15 // pred_check_branch
          %118 = sbr.rel (%p116) target = $region20
        $region19: #{tpu_custom_call.1} parent=15 // pred_region
          %s119 = sand.u32 %s29, 1
          %s120 = scalar_lea.sflag [#allocation5], %s119
          %s121 = sand.u32 %s29, 1
          %s122 = smul.addr %s121, 16
          %s123 = scalar_lea.vmem [#allocation4], %s122
          %s125 = ssub.s32 256, 256
          %126 = vsyncadd %s120, %s125
          %s127 = smul.addr %s19, 2
          %s128 = smul.addr %s127, 128
          %s129 = scalar_lea.hbm %s1, %s128
          %s131 = sshll.u32 %s123, 4
          %s132 = int_to_ptr.vmem [resolvable:$true] %s131
          %134 = dma.hbm_to_vmem [thread:$0]  %s129, 256, %s132, %s120
        $region20: #{tpu_custom_call.1} parent=15 // pred_fallthru
          _
        // Predicated region
        $region21: #{tpu_custom_call.1} parent=15 // pred_check
          %p135 = pneg %p65
        $region22: #{tpu_custom_call.1} parent=15 // pred_check_branch
          %137 = sbr.rel (%p135) target = $region24
        $region23: #{tpu_custom_call.1} parent=15 // pred_region
          %s138 = sand.u32 %s55, 1
          %s139 = scalar_lea.sflag [#allocation8], %s138
          %s140 = sand.u32 %s55, 1
          %s141 = smul.addr %s140, 8
          %s142 = scalar_lea.vmem [#allocation7], %s141
          %s144 = ssub.s32 128, 128
          %145 = vsyncadd %s139, %s144
          %s146 = smul.addr %s19, 128
          %s147 = scalar_lea.hbm %s2, %s146
          %s149 = sshll.u32 %s142, 4
          %s150 = int_to_ptr.vmem [resolvable:$true] %s149
          %152 = dma.hbm_to_vmem [thread:$0]  %s147, 128, %s150, %s139
        $region24: #{tpu_custom_call.1} parent=15 // pred_fallthru
          _
      $region16: #{tpu_custom_call.1} parent=5 // pred_fallthru
        _
      %p153 = scmp.le.s32.totalorder 1, %s19
      %p154 = scmp.lt.s32.totalorder %s19, 3
      %p155 = pnand %p153, %p154
      %p156 = pneg %p155
      // Predicated region
      $region25: #{tpu_custom_call.1} parent=5 // pred_check
        _
      $region26: #{tpu_custom_call.1} parent=5 // pred_check_branch
        %158 = sbr.rel (%p155) target = $region28
      $region27: #{tpu_custom_call.1} parent=5 // pred_region
        %s159 = ssub.s32 %s19, 1
        %s160 = sand.u32 %s32, 1
        %s161 = scalar_lea.sflag [#allocation5], %s160
        %s162 = sand.u32 %s32, 1
        %s163 = smul.addr %s162, 16
        %s164 = scalar_lea.vmem [#allocation4], %s163
        // Predicated region
        $region29: #{tpu_custom_call.1} parent=27 // pred_check
          %p165 = pneg %p45
        $region30: #{tpu_custom_call.1} parent=27 // pred_check_branch
          %167 = sbr.rel (%p165) target = $region32
        $region31: #{tpu_custom_call.1} parent=27 // pred_region
          %168 = dma.done %s161, 256
        $region32: #{tpu_custom_call.1} parent=27 // pred_fallthru
          _
        %s169 = sand.u32 %s58, 1
        %s170 = scalar_lea.sflag [#allocation8], %s169
        %s171 = sand.u32 %s58, 1
        %s172 = smul.addr %s171, 8
        %s173 = scalar_lea.vmem [#allocation7], %s172
        // Predicated region
        $region33: #{tpu_custom_call.1} parent=27 // pred_check
          %p174 = pneg %p71
        $region34: #{tpu_custom_call.1} parent=27 // pred_check_branch
          %176 = sbr.rel (%p174) target = $region36
        $region35: #{tpu_custom_call.1} parent=27 // pred_region
          %177 = dma.done %s170, 128
        $region36: #{tpu_custom_call.1} parent=27 // pred_fallthru
          _
        %s178 = sand.u32 %s32, 1
        %s179 = scalar_lea.sflag [#allocation5], %s178
        %s180 = sand.u32 %s32, 1
        %s181 = smul.addr %s180, 16
        %s182 = scalar_lea.vmem [#allocation4], %s181
        %p183 = pneg %p45
        %p184 = pneg %p42
        %s185 = sand.u32 %s58, 1
        %s186 = scalar_lea.sflag [#allocation8], %s185
        %s187 = sand.u32 %s58, 1
        %s188 = smul.addr %s187, 8
        %s189 = scalar_lea.vmem [#allocation7], %s188
        %p190 = pneg %p71
        %p191 = pneg %p68
        %p192 = pneg %p97
        %p193 = pneg %p94
        %s194 = sand.u32 %s84, 1
        %s195 = scalar_lea.sflag [#allocation6], %s194
        %s196 = sand.u32 %s84, 1
        %s197 = smul.addr %s196, 16
        %s198 = scalar_lea.vmem [#allocation9], %s197
        %v199 = vld [vmem:[%s173] sm:$0xff]
        %v200 = vld [vmem:[%s164] sm:$0xff]
        %v201 = vadd.f32 %v200, %v199
        %202 = vst [vmem:[%s198] sm:$0xff] %v201
        %v203 = vld [vmem:[%s164 + $0x8] sm:$0xff]
        %v204 = vadd.f32 %v203, %v199
        %205 = vst [vmem:[%s198 + $0x8] sm:$0xff] %v204
        %s206 = sand.u32 %s84, 1
        %s207 = scalar_lea.sflag [#allocation6], %s206
        %s208 = sand.u32 %s84, 1
        %s209 = smul.addr %s208, 16
        %s210 = scalar_lea.vmem [#allocation9], %s209
        // Predicated region
        $region37: #{tpu_custom_call.1} parent=27 // pred_check
          %p211 = pneg %p94
        $region38: #{tpu_custom_call.1} parent=27 // pred_check_branch
          %213 = sbr.rel (%p211) target = $region40
        $region39: #{tpu_custom_call.1} parent=27 // pred_region
          %s215 = ssub.s32 256, 256
          %216 = vsyncadd %s207, %s215
          %s217 = smul.addr %s24, 2
          %s218 = smul.addr %s217, 128
          %s219 = scalar_lea.hbm %s3, %s218
          %s221 = sshll.u32 %s210, 4
          %s222 = int_to_ptr.vmem [resolvable:$true] %s221
          %224 = dma.vmem_to_hbm [thread:$0]  %s222, 256, %s219, %s207
        $region40: #{tpu_custom_call.1} parent=27 // pred_fallthru
          _
      $region28: #{tpu_custom_call.1} parent=5 // pred_fallthru
        _
      %p225 = scmp.le.s32.totalorder 2, %s19
      // Predicated region
      $region41: #{tpu_custom_call.1} parent=5 // pred_check
        %p226 = pneg %p225
      $region42: #{tpu_custom_call.1} parent=5 // pred_check_branch
        %228 = sbr.rel (%p226) target = $region44
      $region43: #{tpu_custom_call.1} parent=5 // pred_region
        %s229 = ssub.s32 %s19, 2
        // Predicated region
        $region45: #{tpu_custom_call.1} parent=43 // pred_check
          %p230 = pneg %p100
        $region46: #{tpu_custom_call.1} parent=43 // pred_check_branch
          %232 = sbr.rel (%p230) target = $region48
        $region47: #{tpu_custom_call.1} parent=43 // pred_region
          %s233 = sand.u32 %s85, 1
          %s234 = scalar_lea.sflag [#allocation6], %s233
          %s235 = sand.u32 %s85, 1
          %s236 = smul.addr %s235, 16
          %s237 = scalar_lea.vmem [#allocation9], %s236
          %238 = dma.done %s234, 256
        $region48: #{tpu_custom_call.1} parent=43 // pred_fallthru
          _
      $region44: #{tpu_custom_call.1} parent=5 // pred_fallthru
        _
    $region6: #{tpu_custom_call.1} parent=1 // loop_footer
      %s23 = sadd.s32 1, %s19
    $region7: #{tpu_custom_call.1} parent=1 // loop_footer_branch
      %18 = sbr.rel target = $region3
    $region8: #{tpu_custom_call.1} parent=1 // loop_exit
      _
    %239 = vsyncpa [#allocation5], 1
    %s240 = scalar_lea.sflag [#allocation5], 1
    %241 = vsyncpa %s240, 1
    %242 = vsyncpa [#allocation8], 1
    %s243 = scalar_lea.sflag [#allocation8], 1
    %244 = vsyncpa %s243, 1
    %245 = vsyncpa [#allocation6], 1
    %s246 = scalar_lea.sflag [#allocation6], 1
    %247 = vsyncpa %s246, 1

</llo_original>
